<compile_context>
chip_gen: v7x
topology: tpu7x:2x2x1
jax: 0.10.0
libtpu: 0.0.40
codegen_flags: <defaults>
</compile_context>

<pallas_src>
import functools

import jax
import jax.numpy as jnp
from jax import lax
from jax.experimental import pallas as pl
from jax.experimental.pallas import tpu as pltpu

_EPS = 1e-8
_LANES = 128
_MAX_TILE_ROWS = 8192


def _align_up(x, m):
    return ((x + m - 1) // m) * m


def _align_down(x, m):
    return (x // m) * m


def _cos_tile(x1, x2, *, d, fold_groups):
    """Per-row cosine similarity of one f32 tile.

    fold_groups == 1: x1/x2 are (T, d); returns (T, 1).
    fold_groups  > 1: x1/x2 are (T, 128) with fold_groups original rows of
      length d packed along lanes; returns (T, 128) whose columns >=
      fold_groups are exactly zero (so a full sum only counts valid groups).
    """
    if fold_groups > 1:
        # Segmented row sums on the (idle) MXU: S[l, c] = 1 iff lane l belongs
        # to group c.  Columns >= fold_groups of S are all-zero.
        lane = lax.broadcasted_iota(jnp.int32, (_LANES, _LANES), 0)
        col = lax.broadcasted_iota(jnp.int32, (_LANES, _LANES), 1)
        seg = jnp.where(lane // d == col, 1.0, 0.0).astype(jnp.float32)
        mm = functools.partial(jnp.dot, precision=lax.Precision.HIGHEST,
                               preferred_element_type=jnp.float32)
        dot = mm(x1 * x2, seg)
        s1 = mm(x1 * x1, seg)
        s2 = mm(x2 * x2, seg)
    else:
        w = x1.shape[-1]
        if w > _LANES and w % _LANES == 0:
            # Two-stage reduction: VPU-add the lane-column chunks, then a
            # single cross-lane (XLU) reduce per row.  Also bounds temporaries
            # to (T, 128) per quantity.
            p12 = x1[:, :_LANES] * x2[:, :_LANES]
            p11 = x1[:, :_LANES] * x1[:, :_LANES]
            p22 = x2[:, :_LANES] * x2[:, :_LANES]
            for c in range(1, w // _LANES):
                a = x1[:, c * _LANES:(c + 1) * _LANES]
                b = x2[:, c * _LANES:(c + 1) * _LANES]
                p12 = p12 + a * b
                p11 = p11 + a * a
                p22 = p22 + b * b
            dot = jnp.sum(p12, axis=-1, keepdims=True)
            s1 = jnp.sum(p11, axis=-1, keepdims=True)
            s2 = jnp.sum(p22, axis=-1, keepdims=True)
        else:
            dot = jnp.sum(x1 * x2, axis=-1, keepdims=True)
            s1 = jnp.sum(x1 * x1, axis=-1, keepdims=True)
            s2 = jnp.sum(x2 * x2, axis=-1, keepdims=True)
    # cos = dot / max(||x1||*||x2||, eps) == dot * min(rsqrt(s1)*rsqrt(s2), 1/eps)
    # rsqrt per factor avoids overflowing s1*s2; rsqrt(0)=inf is clamped by the
    # min, and all-zero rows/lanes give dot == 0 -> cos == 0 (matches torch).
    inv = jnp.minimum(lax.rsqrt(s1) * lax.rsqrt(s2), jnp.float32(1.0 / _EPS))
    return dot * inv


def _cosine_loss_kernel(x1_ref, x2_ref, o_ref, acc_ref, *, d, fold_groups,
                        work_rows, row_tile, total_steps, steps_per_split,
                        padded_steps, ragged):
    split = pl.program_id(0)
    j = pl.program_id(1)
    g = split * steps_per_split + j          # global row-block index

    @pl.when(j == 0)
    def _init():
        acc_ref[...] = jnp.zeros_like(acc_ref)

    def _accumulate():
        x1 = x1_ref[...].astype(jnp.float32)
        x2 = x2_ref[...].astype(jnp.float32)
        cos = _cos_tile(x1, x2, d=d, fold_groups=fold_groups)
        if ragged:
            last_block = g == total_steps - 1

            # Only the last block has rows past the true row count; gate the
            # iota/compare/select so every other step skips that work.
            @pl.when(last_block)
            def _tail():
                row = g * row_tile + lax.broadcasted_iota(jnp.int32, cos.shape, 0)
                acc_ref[...] = acc_ref[...] + jnp.sum(
                    jnp.where(row < work_rows, cos, 0.0))

            @pl.when(jnp.logical_not(last_block))
            def _interior():
                acc_ref[...] = acc_ref[...] + jnp.sum(cos)
        else:
            acc_ref[...] = acc_ref[...] + jnp.sum(cos)

    if padded_steps:
        # Odd number of blocks split across 2 cores: the padded tail step is a
        # clamped duplicate fetch whose compute is skipped.
        pl.when(g < total_steps)(_accumulate)
    else:
        _accumulate()

    @pl.when(j == pl.num_programs(1) - 1)
    def _finalize():
        # Write this split's partial sum into element [0,0] of its aligned
        # (8,128) output block (zeros elsewhere), so the wrapper can just sum.
        row_i = lax.broadcasted_iota(jnp.int32, o_ref.shape, 0)
        col_i = lax.broadcasted_iota(jnp.int32, o_ref.shape, 1)
        onehot = jnp.where((row_i == 0) & (col_i == 0), 1.0, 0.0)
        o_ref[...] = acc_ref[...] * onehot


def _vmem_budget():
    """(tile budget bytes, vmem_limit_bytes) chosen per TPU generation."""
    try:
        cap = pltpu.get_tpu_info().vmem_capacity_bytes
    except Exception:
        cap = 64 * 1024 * 1024
    if cap >= 100 * 1024 * 1024:          # v5e / v6e: 128 MiB physical VMEM
        return 48 * 1024 * 1024, 96 * 1024 * 1024
    return 20 * 1024 * 1024, 44 * 1024 * 1024   # v7x-class: 64 MiB per TC


def _pick_row_tile(work_rows, work_d, itemsize, budget):
    d_pad = _align_up(work_d, _LANES)
    sub = max(8, 32 // itemsize)          # packed sublane alignment: 8/16/32
    # 2 inputs x 2 pipeline buffers in the native dtype, plus a conservative
    # allowance for the f32 casts / products / cos temporaries in the body.
    per_row = 4 * d_pad * itemsize + 8 * d_pad * 4
    t = int(budget // per_row)
    t = min(t, _MAX_TILE_ROWS)
    t = max(_align_down(t, sub), sub)
    if work_rows <= t:
        return work_rows, sub             # single block covering the array
    return t, sub


def cosine_similarity_loss(x1, x2, *, _max_tile_rows=None):
    """loss = 1 - mean(cosine_similarity(x1, x2, dim=-1)); returns f32 scalar.

    `_max_tile_rows` is a test hook (multiple of 8) to force multi-step grids.
    """
    assert x1.shape == x2.shape, (x1.shape, x2.shape)
    assert x1.ndim >= 1
    d = x1.shape[-1]
    rows = 1
    for sdim in x1.shape[:-1]:
        rows *= sdim
    assert 0 < rows < 2**31 and d > 0     # int32 row indexing in-kernel
    # TODO(synk): add a feature-dim grid axis for d so large that even an
    # (8, d) tile exceeds the VMEM budget.

    # Lane folding for small feature dims: pack k = 128//d rows per VMEM row.
    fold_groups = 1
    work_rows, work_d = rows, d
    if d < _LANES and _LANES % d == 0:
        k = _LANES // d
        if rows % k == 0 and rows // k >= 8:
            fold_groups = k
            work_rows, work_d = rows // k, _LANES
    x1w = x1.reshape(work_rows, work_d)   # free: contiguous reshape, no copy
    x2w = x2.reshape(work_rows, work_d)

    budget, vmem_limit = _vmem_budget()
    t, sub = _pick_row_tile(work_rows, work_d,
                            jnp.dtype(x1.dtype).itemsize, budget)
    if _max_tile_rows is not None:
        t = max(min(t, _max_tile_rows), 1)

    total_steps = pl.cdiv(work_rows, t)
    num_splits = 2 if total_steps > 1 else 1
    if num_splits == 2 and total_steps % 2 != 0:
        # Best effort: re-tile so both core-splits get equally many real steps.
        t2 = max(_align_up(pl.cdiv(work_rows, total_steps + 1), sub), sub)
        if pl.cdiv(work_rows, t2) % 2 == 0:
            t = t2
            total_steps = pl.cdiv(work_rows, t)
    steps_per_split = pl.cdiv(total_steps, num_splits)
    padded_steps = num_splits * steps_per_split > total_steps
    ragged = (work_rows % t) != 0

    if padded_steps:
        def in_map(s, j):
            return (jnp.minimum(s * steps_per_split + j, total_steps - 1), 0)
    else:
        def in_map(s, j):
            return (s * steps_per_split + j, 0)

    kernel = functools.partial(
        _cosine_loss_kernel,
        d=d, fold_groups=fold_groups, work_rows=work_rows, row_tile=t,
        total_steps=total_steps, steps_per_split=steps_per_split,
        padded_steps=padded_steps, ragged=ragged)

    out = pl.pallas_call(
        kernel,
        out_shape=jax.ShapeDtypeStruct((8 * num_splits, _LANES), jnp.float32),
        grid_spec=pltpu.PrefetchScalarGridSpec(
            num_scalar_prefetch=0,
            grid=(num_splits, steps_per_split),
            in_specs=[
                pl.BlockSpec((t, work_d), in_map),
                pl.BlockSpec((t, work_d), in_map),
            ],
            out_specs=pl.BlockSpec((8, _LANES), lambda s, j: (s, 0)),
            scratch_shapes=[pltpu.VMEM((1, 1), jnp.float32)],
        ),
        compiler_params=pltpu.CompilerParams(
            dimension_semantics=("parallel", "arbitrary"),
            vmem_limit_bytes=vmem_limit,
        ),
    )(x1w, x2w)

    return (1.0 - jnp.sum(out) / jnp.float32(rows)).astype(jnp.float32)


def _reference_loss(x1, x2):
    x1 = x1.astype(jnp.float32)
    x2 = x2.astype(jnp.float32)
    dot = jnp.sum(x1 * x2, axis=-1)
    n1 = jnp.sqrt(jnp.sum(x1 * x1, axis=-1))
    n2 = jnp.sqrt(jnp.sum(x2 * x2, axis=-1))
    cos = dot / jnp.maximum(n1 * n2, _EPS)
    return 1.0 - jnp.mean(cos)


def _check(shape, dtype, key, **kwargs):
    k1, k2 = jax.random.split(key)
    a = jax.random.normal(k1, shape, dtype=jnp.float32).astype(dtype)
    b = jax.random.normal(k2, shape, dtype=jnp.float32).astype(dtype)
    loss = jax.block_until_ready(cosine_similarity_loss(a, b, **kwargs))
    ref = jax.block_until_ready(_reference_loss(a, b))
    assert jnp.allclose(loss, ref, atol=1e-5, rtol=1e-5), (shape, dtype, loss, ref)


if __name__ == "__main__":
    keys = jax.random.split(jax.random.PRNGKey(0), 8)
    # Basic small shapes (single block, small-D plain path).
    _check((2, 8, 32), jnp.float32, keys[0])
    # Row count not divisible by the fold factor (plain path, odd row count).
    _check((3, 7, 32), jnp.float32, keys[1])
    # Lane-folded small-D path using the MXU segmented row sums.
    _check((4, 64, 32), jnp.float32, keys[2])
    # Multi-step grid + dual split + ragged-tail mask, folded path.
    _check((2, 100, 32), jnp.float32, keys[3], _max_tile_rows=16)
    # Odd number of blocks (clamped/skipped padded step) + ragged mask, D=200.
    _check((41, 200), jnp.float32, keys[4], _max_tile_rows=16)
    # bf16 inputs through the folded path (in-register upcast to f32).
    _check((2, 128, 32), jnp.bfloat16, keys[5])
    # D multiple of 128 (> 128): two-stage chunked reduction path.
    _check((16, 256), jnp.float32, keys[6])

    print("KERNEL_OK")
</pallas_src>

<mosaic_0001>
module attributes {stable_mosaic.version = 11 : i64} {
  func.func @_cosine_loss_kernel(%arg0: i32, %arg1: i32, %arg2: memref<16x32xf32, #tpu.memory_space<vmem>>, %arg3: memref<16x32xf32, #tpu.memory_space<vmem>>, %arg4: memref<8x128xf32, #tpu.memory_space<vmem>>, %arg5: memref<1x1xf32, #tpu.memory_space<vmem>>) attributes {dimension_semantics = [#tpu.dimension_semantics<parallel>, #tpu.dimension_semantics<arbitrary>], iteration_bounds = array<i64: 1, 1>, scalar_prefetch = 0 : i64, scratch_operands = 1 : i64, tpu.core_type = #tpu.core_type<tc>, window_params = [{transform_indices = @transform_0, window_bounds = array<i64: 16, 32>}, {transform_indices = @transform_1, window_bounds = array<i64: 16, 32>}, {transform_indices = @transform_2, window_bounds = array<i64: 8, 128>}]} {
    %c0_i32 = arith.constant 0 : i32
    %0 = arith.cmpi eq, %arg1, %c0_i32 : i32
    %1 = arith.extui %0 : i1 to i32
    %c0_i32_0 = arith.constant 0 : i32
    %2 = arith.cmpi ne, %1, %c0_i32_0 : i32
    scf.if %2 {
      %cst_14 = arith.constant 0.000000e+00 : f32
      %31 = vector.broadcast %cst_14 : f32 to vector<1x1xf32>
      %c0_15 = arith.constant 0 : index
      %c0_16 = arith.constant 0 : index
      %32 = vector.load %arg5[%c0_15, %c0_16] : memref<1x1xf32, #tpu.memory_space<vmem>>, vector<1x1xf32>
      tpu.vector_store %arg5[%c0_15, %c0_16], %31 {strides = array<i32>} : memref<1x1xf32, #tpu.memory_space<vmem>>, vector<1x1xf32>,
    } else {
    }
    %c0 = arith.constant 0 : index
    %c0_1 = arith.constant 0 : index
    %3 = vector.load %arg2[%c0, %c0_1] : memref<16x32xf32, #tpu.memory_space<vmem>>, vector<16x32xf32>
    %c0_2 = arith.constant 0 : index
    %c0_3 = arith.constant 0 : index
    %4 = vector.load %arg3[%c0_2, %c0_3] : memref<16x32xf32, #tpu.memory_space<vmem>>, vector<16x32xf32>
    %5 = arith.mulf %3, %4 : vector<16x32xf32>
    %cst = arith.constant dense<0.000000e+00> : vector<16xf32>
    %6 = vector.multi_reduction <add>, %5, %cst [1] : vector<16x32xf32> to vector<16xf32>
    %7 = vector.shape_cast %6 : vector<16xf32> to vector<16x1xf32>
    %8 = arith.mulf %3, %3 : vector<16x32xf32>
    %cst_4 = arith.constant dense<0.000000e+00> : vector<16xf32>
    %9 = vector.multi_reduction <add>, %8, %cst_4 [1] : vector<16x32xf32> to vector<16xf32>
    %10 = vector.shape_cast %9 : vector<16xf32> to vector<16x1xf32>
    %11 = arith.mulf %4, %4 : vector<16x32xf32>
    %cst_5 = arith.constant dense<0.000000e+00> : vector<16xf32>
    %12 = vector.multi_reduction <add>, %11, %cst_5 [1] : vector<16x32xf32> to vector<16xf32>
    %13 = vector.shape_cast %12 : vector<16xf32> to vector<16x1xf32>
    %14 = math.rsqrt %10 : vector<16x1xf32>
    %15 = math.rsqrt %13 : vector<16x1xf32>
    %16 = arith.mulf %14, %15 : vector<16x1xf32>
    %cst_6 = arith.constant 1.000000e+08 : f32
    %17 = vector.broadcast %cst_6 : f32 to vector<16x1xf32>
    %18 = arith.minimumf %16, %17 : vector<16x1xf32>
    %19 = arith.mulf %7, %18 : vector<16x1xf32>
    %c0_7 = arith.constant 0 : index
    %c0_8 = arith.constant 0 : index
    %20 = vector.load %arg5[%c0_7, %c0_8] : memref<1x1xf32, #tpu.memory_space<vmem>>, vector<1x1xf32>
    %21 = vector.shape_cast %19 : vector<16x1xf32> to vector<1x16x1xf32>
    %cst_9 = arith.constant dense<0.000000e+00> : vector<1xf32>
    %22 = vector.multi_reduction <add>, %21, %cst_9 [1, 2] : vector<1x16x1xf32> to vector<1xf32>
    %23 = vector.shape_cast %22 : vector<1xf32> to vector<1x1x1xf32>
    %24 = vector.extract %23[0, 0, 0] : f32 from vector<1x1x1xf32>
    %25 = vector.broadcast %24 : f32 to vector<1x1xf32>
    %26 = arith.addf %20, %25 : vector<1x1xf32>
    %c0_10 = arith.constant 0 : index
    %c0_11 = arith.constant 0 : index
    %27 = vector.load %arg5[%c0_10, %c0_11] : memref<1x1xf32, #tpu.memory_space<vmem>>, vector<1x1xf32>
    tpu.vector_store %arg5[%c0_10, %c0_11], %26 {strides = array<i32>} : memref<1x1xf32, #tpu.memory_space<vmem>>, vector<1x1xf32>,
    %c0_i32_12 = arith.constant 0 : i32
    %28 = arith.cmpi eq, %arg1, %c0_i32_12 : i32
    %29 = arith.extui %28 : i1 to i32
    %c0_i32_13 = arith.constant 0 : i32
    %30 = arith.cmpi ne, %29, %c0_i32_13 : i32
    scf.if %30 {
      %31 = tpu.iota {dimensions = array<i32: 0>} : vector<8x128xi32>
      %32 = tpu.iota {dimensions = array<i32: 1>} : vector<8x128xi32>
      %c0_i32_14 = arith.constant 0 : i32
      %33 = vector.broadcast %c0_i32_14 : i32 to vector<8x128xi32>
      %34 = arith.cmpi eq, %31, %33 : vector<8x128xi32>
      %c0_i32_15 = arith.constant 0 : i32
      %35 = vector.broadcast %c0_i32_15 : i32 to vector<8x128xi32>
      %36 = arith.cmpi eq, %32, %35 : vector<8x128xi32>
      %37 = arith.andi %34, %36 : vector<8x128xi1>
      %cst_16 = arith.constant 1.000000e+00 : f32
      %cst_17 = arith.constant 0.000000e+00 : f32
      %38 = vector.broadcast %cst_16 : f32 to vector<8x128xf32>
      %39 = vector.broadcast %cst_17 : f32 to vector<8x128xf32>
      %40 = arith.select %37, %38, %39 : vector<8x128xi1>, vector<8x128xf32>
      %c0_18 = arith.constant 0 : index
      %c0_19 = arith.constant 0 : index
      %41 = vector.load %arg5[%c0_18, %c0_19] : memref<1x1xf32, #tpu.memory_space<vmem>>, vector<1x1xf32>
      %42 = vector.broadcast %41 : vector<1x1xf32> to vector<8x128xf32>
      %43 = arith.mulf %42, %40 : vector<8x128xf32>
      %c0_20 = arith.constant 0 : index
      %c0_21 = arith.constant 0 : index
      %44 = vector.load %arg4[%c0_20, %c0_21] : memref<8x128xf32, #tpu.memory_space<vmem>>, vector<8x128xf32>
      tpu.vector_store %arg4[%c0_20, %c0_21], %43 {strides = array<i32>} : memref<8x128xf32, #tpu.memory_space<vmem>>, vector<8x128xf32>,
    } else {
    }
    return
  }
  func.func @transform_0(%arg0: i32, %arg1: i32) -> (i32, i32) {
    %c1_i32 = arith.constant 1 : i32
    %0 = arith.muli %arg0, %c1_i32 : i32
    %1 = arith.addi %0, %arg1 : i32
    %c0_i32 = arith.constant 0 : i32
    %c0_i32_0 = arith.constant 0 : i32
    return %1, %c0_i32 : i32, i32
  }
  func.func @transform_1(%arg0: i32, %arg1: i32) -> (i32, i32) {
    %c1_i32 = arith.constant 1 : i32
    %0 = arith.muli %arg0, %c1_i32 : i32
    %1 = arith.addi %0, %arg1 : i32
    %c0_i32 = arith.constant 0 : i32
    %c0_i32_0 = arith.constant 0 : i32
    return %1, %c0_i32 : i32, i32
  }
  func.func @transform_2(%arg0: i32, %arg1: i32) -> (i32, i32) {
    %c0_i32 = arith.constant 0 : i32
    %c0_i32_0 = arith.constant 0 : i32
    return %arg0, %c0_i32 : i32, i32
  }
}

</mosaic_0001>

<llo_original>
// kernel: tpu_custom_call.1
$region0: #{tpu_custom_call.1}
  #allocation0 [shape = 'u32[]', space=smem, size = 0x4, offset = 0x4, fixed_abs, tag = 'smem constant byte address 0x4 - core index']
  #allocation1 [shape = 'u32[144,128]{1,0:T(1,128)}', space=vmem, size = 0x12000, scoped, tag = 'internal scratch']
  #allocation2 [shape = 'f32[1,1]{1,0:T(1,128)}', space=vmem, size = 0x200, scoped, tag = 'scratch operand']
  %s0 = inlined_call_operand.hbm [shape: f32[16,32], index: 0, kind: input, shape index: {}]
  %s1 = inlined_call_operand.hbm [shape: f32[16,32], index: 1, kind: input, shape index: {}]
  %s2 = inlined_call_operand.hbm [shape: f32[8,128], index: 2, kind: output, shape index: {}]
  %s3 = sld [smem:[#allocation0]]
  $region34: #{tpu_custom_call.1} parent=0
    _
  %s5 = ssub.s32 1, %s3
  %s6 = scalar_select 0, %s5, %s3
  $region1: #{tpu_custom_call.1} parent=0
    #allocation3 [shape = 'u8[8192]{0}', space=vmem, size = 0x2000, scoped, tag = 'input window, operand 0, single buffered']
    #allocation4 [shape = 's32[1]{0}', space=sflag, size = 0x4, scoped, tag = 'scoped memory for tpu_custom_call.1']
    #allocation5 [shape = 's32[1]{0}', space=sflag, size = 0x4, scoped, tag = 'scoped memory for tpu_custom_call.1']
    #allocation6 [shape = 'u8[8192]{0}', space=vmem, size = 0x2000, scoped, tag = 'input window, operand 1, single buffered']
    #allocation7 [shape = 's32[1]{0}', space=sflag, size = 0x4, scoped, tag = 'scoped memory for tpu_custom_call.1']
    #allocation8 [shape = 'u8[4096]{0}', space=vmem, size = 0x1000, scoped, tag = 'output window, operand 0, single buffered']
    %7 = vsyncpa [#allocation4], 0
    %8 = vsyncpa [#allocation7], 0
    %9 = vsyncpa [#allocation5], 0
    // Predicated region
    $region2: #{tpu_custom_call.1} parent=1 // pred_check
      _
    $region3: #{tpu_custom_call.1} parent=1 // pred_check_branch
      %11 = sbr.rel (0) target = $region5
    $region4: #{tpu_custom_call.1} parent=1 // pred_region
      %s12 = sadd.s32 0, 0
      %s13 = smul.u32 2, %s12
      %s15 = ssub.s32 256, 256
      %16 = vsyncadd [#allocation4], %s15
      %s17 = smul.addr %s13, 128
      %s18 = scalar_lea.hbm %s0, %s17
      %s19 = sshll.u32 [#allocation3], 4
      %s20 = int_to_ptr.vmem [resolvable:$true] %s19
      %25 = dma.hbm_to_vmem [thread:$0]  %s18, 256, %s20, [#allocation4], 128, 128, 8
    $region5: #{tpu_custom_call.1} parent=1 // pred_fallthru
      _
    // Predicated region
    $region6: #{tpu_custom_call.1} parent=1 // pred_check
      _
    $region7: #{tpu_custom_call.1} parent=1 // pred_check_branch
      %27 = sbr.rel (0) target = $region9
    $region8: #{tpu_custom_call.1} parent=1 // pred_region
      %s28 = sadd.s32 0, 0
      %s29 = smul.u32 2, %s28
      %s31 = ssub.s32 256, 256
      %32 = vsyncadd [#allocation7], %s31
      %s33 = smul.addr %s29, 128
      %s34 = scalar_lea.hbm %s1, %s33
      %s35 = sshll.u32 [#allocation6], 4
      %s36 = int_to_ptr.vmem [resolvable:$true] %s35
      %41 = dma.hbm_to_vmem [thread:$0]  %s34, 256, %s36, [#allocation7], 128, 128, 8
    $region9: #{tpu_custom_call.1} parent=1 // pred_fallthru
      _
    // Predicated region
    $region10: #{tpu_custom_call.1} parent=1 // pred_check
      _
    $region11: #{tpu_custom_call.1} parent=1 // pred_check_branch
      %43 = sbr.rel (0) target = $region13
    $region12: #{tpu_custom_call.1} parent=1 // pred_region
      %44 = dma.done [#allocation4], 256
    $region13: #{tpu_custom_call.1} parent=1 // pred_fallthru
      _
    // Predicated region
    $region14: #{tpu_custom_call.1} parent=1 // pred_check
      _
    $region15: #{tpu_custom_call.1} parent=1 // pred_check_branch
      %46 = sbr.rel (0) target = $region17
    $region16: #{tpu_custom_call.1} parent=1 // pred_region
      %47 = dma.done [#allocation7], 256
    $region17: #{tpu_custom_call.1} parent=1 // pred_fallthru
      _
    %s48 = sadd.s32 0, 0
    %s49 = smul.u32 2, %s48
    %s50 = sadd.s32 0, 0
    %s51 = smul.u32 2, %s50
    %p52 = scmp.eq.s32.totalorder 0, 0
    // Predicated region
    $region18: #{tpu_custom_call.1} parent=1 // pred_check
      %p53 = pneg %p52
    $region19: #{tpu_custom_call.1} parent=1 // pred_check_branch
      %55 = sbr.rel (%p53) target = $region21
    $region20: #{tpu_custom_call.1} parent=1 // pred_region
      %vm56 = vcmask 0
      %57 = vst.msk [vmem:[#allocation2] sm:$0x1] %vm56, 0.0
    $region21: #{tpu_custom_call.1} parent=1 // pred_fallthru
      _
    %v58 = vld [vmem:[#allocation3] sm:$0xff]
    %v59 = vld [vmem:[#allocation3 + $0x8] sm:$0xff]
    %v60 = vld [vmem:[#allocation6] sm:$0xff]
    %v61 = vld [vmem:[#allocation6 + $0x8] sm:$0xff]
    %v62 = vmul.f32 %v58, %v60
    %v63 = vmul.f32 %v59, %v61
    %vm64 = vcmask 261120
    %v65 = vsel %vm64, %v62, 0.0
    %66 = vadd.xlane.f32.xlu0 %v65
    %v67 = vpop.xlane.xlu0 %66
    %v68 = vsel %vm64, %v63, 0.0
    %69 = vadd.xlane.f32.xlu0 %v68
    %v70 = vpop.xlane.xlu0 %69
    %v71 = vmul.f32 %v58, %v58
    %v72 = vmul.f32 %v59, %v59
    %v73 = vsel %vm64, %v71, 0.0
    %74 = vadd.xlane.f32.xlu0 %v73
    %v75 = vpop.xlane.xlu0 %74
    %v76 = vsel %vm64, %v72, 0.0
    %77 = vadd.xlane.f32.xlu0 %v76
    %v78 = vpop.xlane.xlu0 %77
    %v79 = vmul.f32 %v60, %v60
    %v80 = vmul.f32 %v61, %v61
    %v81 = vsel %vm64, %v79, 0.0
    %82 = vadd.xlane.f32.xlu0 %v81
    %v83 = vpop.xlane.xlu0 %82
    %v84 = vsel %vm64, %v80, 0.0
    %85 = vadd.xlane.f32.xlu0 %v84
    %v86 = vpop.xlane.xlu0 %85
    %v87 = vrsqrt.pop %v75
    %v88 = vrsqrt.pop %v78
    %v89 = vrsqrt.pop %v83
    %v90 = vrsqrt.pop %v86
    %v91 = vmul.f32 %v87, %v89
    %v92 = vmul.f32 %v88, %v90
    %v93 = vmin.f32 %v91, 1e+08
    %v94 = vmin.f32 %v92, 1e+08
    %v95 = vmul.f32 %v67, %v93
    %v96 = vmul.f32 %v70, %v94
    %v97 = vld [vmem:[#allocation2] sm:$0x1]
    %vm98 = vcmask 7168
    %v99 = vsel %vm98, %v95, 0.0
    %v100 = vsel %vm98, %v96, 0.0
    %v101 = vadd.f32 %v99, %v100
    %102 = vadd.xlane.f32.xlu0 %v101
    %v103 = vpop.xlane.xlu0 %102
    %v104 = vrot.slane %v103, 4
    %v105 = vadd.f32 %v103, %v104
    %v106 = vrot.slane %v105, 2
    %v107 = vadd.f32 %v105, %v106
    %v108 = vrot.slane %v107, 1
    %v109 = vadd.f32 %v107, %v108
    %s110 = vtos %v109
    %v111 = vstv %s110
    %v112 = vadd.f32 %v97, %v111
    %vm113 = vcmask 0
    %114 = vst.msk [vmem:[#allocation2] sm:$0x1] %vm113, %v112
    // Predicated region
    $region22: #{tpu_custom_call.1} parent=1 // pred_check
      %p115 = pneg %p52
    $region23: #{tpu_custom_call.1} parent=1 // pred_check_branch
      %117 = sbr.rel (%p115) target = $region25
    $region24: #{tpu_custom_call.1} parent=1 // pred_region
      %v118 = vlaneseq
      %v119 = vshrl.u32 %v118, 7
      %v120 = vlaneseq
      %v121 = vand.u32 %v120, 127
      %vm122 = vcmp.eq.s32.totalorder %v119, 0
      %vm123 = vcmp.eq.s32.totalorder %v121, 0
      %vm124 = vmand %vm122, %vm123
      %v125 = vsel %vm124, 1.0, 0.0
      %v126 = vld [vmem:[#allocation2] sm:$0x1]
      %v128 = vlaneseq
      %v129 = vshrl.u32 %v128, 7
      %v130 = vsub.s32 0, %v129
      %v131 = vrot.slane %v126, %v130
      %132 = vset.pattern.permute.xlu0 0
      %133 = vperm.xlu0 %132, %v131
      %v134 = vpop.permute.xlu0 %133
      %v136 = vmul.f32 %v134, %v125
      %137 = vst [vmem:[#allocation8] sm:$0xff] %v136
    $region25: #{tpu_custom_call.1} parent=1 // pred_fallthru
      _
    // Predicated region
    $region26: #{tpu_custom_call.1} parent=1 // pred_check
      _
    $region27: #{tpu_custom_call.1} parent=1 // pred_check_branch
      %139 = sbr.rel (0) target = $region29
    $region28: #{tpu_custom_call.1} parent=1 // pred_region
      %s141 = ssub.s32 128, 128
      %142 = vsyncadd [#allocation5], %s141
      %s144 = sshll.u32 [#allocation8], 4
      %s145 = int_to_ptr.vmem [resolvable:$true] %s144
      %147 = dma.vmem_to_hbm [thread:$0]  %s145, 128, %s2, [#allocation5]
    $region29: #{tpu_custom_call.1} parent=1 // pred_fallthru
      _
    // Predicated region
    $region30: #{tpu_custom_call.1} parent=1 // pred_check
      _
    $region31: #{tpu_custom_call.1} parent=1 // pred_check_branch
      %149 = sbr.rel (0) target = $region33
    $region32: #{tpu_custom_call.1} parent=1 // pred_region
      %150 = dma.done [#allocation5], 128
    $region33: #{tpu_custom_call.1} parent=1 // pred_fallthru
      _
    %151 = vsyncpa [#allocation4], 1
    %152 = vsyncpa [#allocation7], 1
    %153 = vsyncpa [#allocation5], 1

</llo_original>
